<compile_context>
chip_gen: v6e
topology: v6e:2x2x1
jax: 0.10.0
libtpu: 0.0.40
codegen_flags: <defaults>
</compile_context>

<pallas_src>
import functools
import math

import jax
import jax.numpy as jnp
from jax import lax
from jax.experimental import pallas as pl
from jax.experimental.pallas import tpu as pltpu


_HEAD = 128  # aligned zero head of the in-VMEM strip (only lane _HEAD-1 is ever read)


def _fe_kernel(xc_ref, xh_ref, ml_ref, mr_ref, wall_ref, w31_ref, wf_ref,
               out_ref, ext_ref):
    # xc_ref : (Cin, T)      bf16  flat center rows (padded rows rt*R .. rt*R+R-1)
    # xh_ref : (Cin, 8, W)   bf16  halo rows (padded rows (rt+1)*R ..); rows 0,1 used
    # ml_ref : (1, T)        bf16  mask: 0 where col == 0      (kills kx=0 taps)
    # mr_ref : (1, T)        bf16  mask: 0 where col == W-1    (kills kx=2 taps)
    # wall_ref:(2*Cout,9*Cin) bf16  conv3 taps (ky,kx row-major) + conv1 fused in rows Cout:
    # w31_ref: (Cout, Cout)  bf16  conv3_1 (1x1)
    # wf_ref : (Cout, Cout)  bf16  conv1_fusion (1x1)
    # out_ref: (Cout, T)     out_dtype, lane-dense (T % 128 == 0 -> unmasked stores)
    # ext_ref: (Cin, _HEAD + T + 2*W + 8) bf16 scratch strip
    cin, T = xc_ref.shape
    W = xh_ref.shape[2]
    cout = w31_ref.shape[0]

    # ---- assemble the extended strip: [zero head | center | halo row0 | halo row1 | 0] ----
    ext_ref[:, pl.ds(0, _HEAD)] = jnp.zeros((cin, _HEAD), ext_ref.dtype)
    ext_ref[:, pl.ds(_HEAD, T)] = xc_ref[...]                    # aligned big store
    xh = xh_ref[...]
    ext_ref[:, pl.ds(_HEAD + T, W)] = xh[:, 0, :]
    ext_ref[:, pl.ds(_HEAD + T + W, W)] = xh[:, 1, :]
    ext_ref[:, pl.ds(_HEAD + T + 2 * W, 8)] = jnp.zeros((cin, 8), ext_ref.dtype)

    ml = ml_ref[...]
    mr = mr_ref[...]

    # ---- in-VMEM tap construction (the old HBM im2col), then one wide-K matmul ----
    # tap(ky,kx)[s] = padded_input[row rt*R + s//W + ky, col s%W + kx - 1]
    #              = ext[_HEAD - 1 + ky*W + kx + s]   (column-boundary taps masked to 0)
    taps = []
    for ky in range(3):
        for kx in range(3):
            t = ext_ref[:, pl.ds(_HEAD - 1 + ky * W + kx, T)]
            if kx == 0:
                t = t * ml
            elif kx == 2:
                t = t * mr
            taps.append(t)
    p9 = jnp.concatenate(taps, axis=0)                           # (9*Cin, T) bf16

    # conv3 + conv1 in a single MXU matmul, f32 accumulation.
    acc = jnp.dot(wall_ref[...], p9, preferred_element_type=jnp.float32)  # (2*Cout, T)
    f3 = jnp.maximum(acc[:cout, :], 0.0)
    f1 = jnp.maximum(acc[cout:, :], 0.0)

    f31 = jnp.maximum(jnp.dot(w31_ref[...], f3.astype(jnp.bfloat16),
                              preferred_element_type=jnp.float32), 0.0)
    ff = jnp.maximum(f31 + f1, 0.0)
    o = jnp.maximum(jnp.dot(wf_ref[...], ff.astype(jnp.bfloat16),
                            preferred_element_type=jnp.float32), 0.0)
    out_ref[...] = o.astype(out_ref.dtype)


def _round_up(a, b):
    return -(-a // b) * b


def _vmem_limit_bytes():
    """Generation-aware scoped-VMEM limit (v7x has only 64 MiB physical)."""
    try:
        cap = getattr(pltpu.get_tpu_info(), "vmem_capacity_bytes", None)
    except Exception:
        cap = None
    if cap is not None and cap >= 100 * (1 << 20):
        return 64 * (1 << 20)      # v5e / v6e (128 MiB physical)
    return 40 * (1 << 20)          # v7x (64 MiB physical) or unknown -> conservative


def _choose_row_tile(H, W, cin, cout, out_bytes, vmem_limit):
    """Rows per spatial tile. Constraints: R % 8 == 0 (8-row halo blocks) and
    R*W % 128 == 0 (lane-dense flat blocks / unmasked stores)."""
    r_gran = math.lcm(8, 128 // math.gcd(W, 128))
    # Rough per-lane working-set bytes (double-buffered I/O, bf16 tap assembly,
    # f32 intermediates), with ~1.5x headroom.
    per_lane = int(1.5 * (2 * cin * 2 * 2          # input blocks, 2 buffers, bf16
                          + 2 * cout * out_bytes   # output blocks, 2 buffers
                          + 19 * cin * 2           # ext strip + 9 taps + p9 (bf16)
                          + 7 * cout * 4           # acc + f32 temps
                          + 8))                    # masks etc.
    max_lanes = min(32768, max(r_gran * W, (vmem_limit // 2) // per_lane))
    rows = max(r_gran, (max_lanes // W) // r_gran * r_gran)
    return min(rows, _round_up(H, r_gran))


@functools.partial(jax.jit, static_argnames=("out_dtype", "row_tile"))
def feature_enhancement(x_nchw, w3_oihw, w31_oi, w1_oi, wf_oi, *,
                        out_dtype=None, row_tile=None):
    """x_nchw: (N, Cin, H, W) f32.  Weights in PyTorch convention:
       w3_oihw: (Cout, Cin, 3, 3); w31/w1/wf as (Cout, Cin) 1x1 convs.
       Requires Cin == Cout (the PyTorch module only type-checks then)."""
    N, Cin, H, W = x_nchw.shape
    Cout = w3_oihw.shape[0]
    if out_dtype is None:
        out_dtype = x_nchw.dtype           # review: output dtype configurable (bf16 halves writeback)
    out_bytes = jnp.dtype(out_dtype).itemsize

    vmem_limit = _vmem_limit_bytes()
    r_gran = math.lcm(8, 128 // math.gcd(W, 128))
    if row_tile is None:
        R = _choose_row_tile(H, W, Cin, Cout, out_bytes, vmem_limit)
    else:
        R = max(r_gran, _round_up(row_tile, r_gran))
    n_rt = -(-H // R)                      # cdiv
    T = R * W                              # lanes per spatial tile (multiple of 128)
    Hrows = n_rt * R + 8                   # 1 zero row on top, >=7 below (halo slack)

    # bf16 cast FIRST, then a row-only zero pad (single fused wrapper pass; no im2col slab).
    xb = x_nchw.astype(jnp.bfloat16)
    xpad = jnp.pad(xb, ((0, 0), (0, 0), (1, Hrows - H - 1), (0, 0)))
    x4d = xpad                               # (N, Cin, Hrows, W)   halo view
    xflat = xpad.reshape(N, Cin, Hrows * W)  # free reshape          streaming view

    # Column-boundary masks (same for every tile -> constant index_map, VMEM-resident).
    col = lax.broadcasted_iota(jnp.int32, (1, T), 1) % W
    mask_l = (col != 0).astype(jnp.bfloat16)
    mask_r = (col != (W - 1)).astype(jnp.bfloat16)

    # conv3 weights flattened over the 9 taps (ky,kx row-major); conv1 fused in as Cout
    # extra output rows acting only on the centre (ky=1,kx=1) tap block.
    w3t = jnp.concatenate([w3_oihw[:, :, ky, kx]
                           for ky in range(3) for kx in range(3)], axis=1)   # (Cout, 9*Cin)
    zblk = jnp.zeros((Cout, 4 * Cin), w1_oi.dtype)
    w1row = jnp.concatenate([zblk, w1_oi, zblk], axis=1)                     # (Cout, 9*Cin)
    w_all = jnp.concatenate([w3t, w1row], axis=0).astype(jnp.bfloat16)       # (2*Cout, 9*Cin)
    w31 = w31_oi.astype(jnp.bfloat16)
    wf = wf_oi.astype(jnp.bfloat16)

    out_flat = pl.pallas_call(
        _fe_kernel,
        out_shape=jax.ShapeDtypeStruct((N, Cout, H * W), out_dtype),
        grid=(N, n_rt),
        in_specs=[
            # streaming center block: (Cin, T) flat rows, long contiguous DMA runs
            pl.BlockSpec((None, Cin, T), lambda n, rt: (n, 0, rt)),
            # tiny 8-row halo block just below the tile (rows 0,1 of it are used)
            pl.BlockSpec((None, Cin, 8, W), lambda n, rt: (n, 0, (rt + 1) * (R // 8), 0)),
            # constant, VMEM-resident masks and weights
            pl.BlockSpec((1, T), lambda n, rt: (0, 0)),
            pl.BlockSpec((1, T), lambda n, rt: (0, 0)),
            pl.BlockSpec((2 * Cout, 9 * Cin), lambda n, rt: (0, 0)),
            pl.BlockSpec((Cout, Cout), lambda n, rt: (0, 0)),
            pl.BlockSpec((Cout, Cout), lambda n, rt: (0, 0)),
        ],
        out_specs=pl.BlockSpec((None, Cout, T), lambda n, rt: (n, 0, rt)),
        scratch_shapes=[pltpu.VMEM((Cin, _HEAD + T + 2 * W + 8), jnp.bfloat16)],
        compiler_params=pltpu.CompilerParams(
            dimension_semantics=("parallel", "parallel"),   # megacore sharding on v7x
            vmem_limit_bytes=vmem_limit),
    )(xflat, x4d, mask_l, mask_r, w_all, w31, wf)

    # Kernel already emitted channels-first flat spatial -> free reshape to NCHW.
    return out_flat.reshape(N, Cout, H, W)


def _reference(x_nchw, w3_oihw, w31_oi, w1_oi, wf_oi):
    """Pure-JAX reference mirroring the PyTorch forward (NCHW, f32)."""
    def conv(x, w):
        kh, kw = w.shape[2], w.shape[3]
        return lax.conv_general_dilated(
            x, w, (1, 1),
            [((kh - 1) // 2, (kh - 1) // 2), ((kw - 1) // 2, (kw - 1) // 2)],
            dimension_numbers=("NCHW", "OIHW", "NCHW"))

    relu = lambda v: jnp.maximum(v, 0.0)
    f3 = relu(conv(x_nchw, w3_oihw))
    f3_1 = relu(conv(f3, w31_oi[:, :, None, None]))
    f1 = relu(conv(x_nchw, w1_oi[:, :, None, None]))
    ff = relu(f3_1 + f1)
    return relu(conv(ff, wf_oi[:, :, None, None]))


if __name__ == "__main__":
    key = jax.random.PRNGKey(0)
    N, C, H, W = 2, 4, 16, 16   # in_channels == out_channels == 4

    k_x, k3, k31, k1, kf = jax.random.split(key, 5)
    x = jax.random.normal(k_x, (N, C, H, W), jnp.float32)
    w3 = jax.random.normal(k3, (C, C, 3, 3), jnp.float32) * 0.2
    w31 = jax.random.normal(k31, (C, C), jnp.float32) * 0.3
    w1 = jax.random.normal(k1, (C, C), jnp.float32) * 0.3
    wf = jax.random.normal(kf, (C, C), jnp.float32) * 0.3

    out = feature_enhancement(x, w3, w31, w1, wf)
    jax.block_until_ready(out)
    assert out.shape == (N, C, H, W) and out.dtype == jnp.float32

    # Also exercise the multi-row-tile path (inter-tile halo carrying real rows).
    out_tiled = feature_enhancement(x, w3, w31, w1, wf, row_tile=8)
    jax.block_until_ready(out_tiled)

    # Reference on bf16-rounded inputs/weights (the kernel feeds the MXU in bf16 and
    # accumulates in f32); only intermediate rounding differs.
    rnd = lambda a: a.astype(jnp.bfloat16).astype(jnp.float32)
    ref = _reference(rnd(x), rnd(w3), rnd(w31), rnd(w1), rnd(wf))
    err = float(jnp.max(jnp.abs(out - ref)))
    err_t = float(jnp.max(jnp.abs(out_tiled - ref)))
    assert jnp.allclose(out, ref, atol=5e-2, rtol=5e-2), f"mismatch, max abs err {err}"
    assert jnp.allclose(out_tiled, ref, atol=5e-2, rtol=5e-2), f"tiled mismatch, max abs err {err_t}"

    print("KERNEL_OK")
</pallas_src>

<mosaic_0001>
module attributes {stable_mosaic.version = 11 : i64} {
  func.func @_fe_kernel(%arg0: i32, %arg1: i32, %arg2: memref<1x4x256xbf16, #tpu.memory_space<vmem>>, %arg3: memref<1x4x8x16xbf16, #tpu.memory_space<vmem>>, %arg4: memref<1x256xbf16, #tpu.memory_space<vmem>>, %arg5: memref<1x256xbf16, #tpu.memory_space<vmem>>, %arg6: memref<8x36xbf16, #tpu.memory_space<vmem>>, %arg7: memref<4x4xbf16, #tpu.memory_space<vmem>>, %arg8: memref<4x4xbf16, #tpu.memory_space<vmem>>, %arg9: memref<1x4x256xf32, #tpu.memory_space<vmem>>, %arg10: memref<4x424xbf16, #tpu.memory_space<vmem>>) attributes {dimension_semantics = [#tpu.dimension_semantics<parallel>, #tpu.dimension_semantics<parallel>], iteration_bounds = array<i64: 2, 1>, scalar_prefetch = 0 : i64, scratch_operands = 1 : i64, tpu.core_type = #tpu.core_type<tc>, window_params = [{transform_indices = @transform_0, window_bounds = array<i64: 1, 4, 256>}, {transform_indices = @transform_1, window_bounds = array<i64: 1, 4, 8, 16>}, {pipeline_mode = #tpu.pipeline_mode<synchronous>, transform_indices = @transform_2, window_bounds = array<i64: 1, 256>}, {pipeline_mode = #tpu.pipeline_mode<synchronous>, transform_indices = @transform_3, window_bounds = array<i64: 1, 256>}, {pipeline_mode = #tpu.pipeline_mode<synchronous>, transform_indices = @transform_4, window_bounds = array<i64: 8, 36>}, {pipeline_mode = #tpu.pipeline_mode<synchronous>, transform_indices = @transform_5, window_bounds = array<i64: 4, 4>}, {pipeline_mode = #tpu.pipeline_mode<synchronous>, transform_indices = @transform_6, window_bounds = array<i64: 4, 4>}, {transform_indices = @transform_7, window_bounds = array<i64: 1, 4, 256>}]} {
    %cst = arith.constant 0.000000e+00 : bf16
    %0 = vector.broadcast %cst : bf16 to vector<4x128xbf16>
    %c0 = arith.constant 0 : index
    %c0_0 = arith.constant 0 : index
    %1 = vector.load %arg10[%c0, %c0_0] : memref<4x424xbf16, #tpu.memory_space<vmem>>, vector<4x128xbf16>
    tpu.vector_store %arg10[%c0, %c0_0], %0 {strides = array<i32>} : memref<4x424xbf16, #tpu.memory_space<vmem>>, vector<4x128xbf16>,
    %c0_1 = arith.constant 0 : index
    %c0_2 = arith.constant 0 : index
    %c0_3 = arith.constant 0 : index
    %2 = vector.load %arg2[%c0_1, %c0_2, %c0_3] : memref<1x4x256xbf16, #tpu.memory_space<vmem>>, vector<1x4x256xbf16>
    %3 = vector.shape_cast %2 : vector<1x4x256xbf16> to vector<4x256xbf16>
    %c0_4 = arith.constant 0 : index
    %c128 = arith.constant 128 : index
    %4 = vector.load %arg10[%c0_4, %c128] : memref<4x424xbf16, #tpu.memory_space<vmem>>, vector<4x256xbf16>
    tpu.vector_store %arg10[%c0_4, %c128], %3 {strides = array<i32>} : memref<4x424xbf16, #tpu.memory_space<vmem>>, vector<4x256xbf16>,
    %c0_5 = arith.constant 0 : index
    %c0_6 = arith.constant 0 : index
    %c0_7 = arith.constant 0 : index
    %c0_8 = arith.constant 0 : index
    %5 = vector.load %arg3[%c0_5, %c0_6, %c0_7, %c0_8] : memref<1x4x8x16xbf16, #tpu.memory_space<vmem>>, vector<1x4x8x16xbf16>
    %6 = vector.shape_cast %5 : vector<1x4x8x16xbf16> to vector<4x8x16xbf16>
    %7 = vector.extract_strided_slice %6 {offsets = [0, 0, 0], sizes = [4, 1, 16], strides = [1, 1, 1]} : vector<4x8x16xbf16> to vector<4x1x16xbf16>
    %8 = vector.shape_cast %7 : vector<4x1x16xbf16> to vector<4x16xbf16>
    %c0_9 = arith.constant 0 : index
    %c384 = arith.constant 384 : index
    %9 = vector.load %arg10[%c0_9, %c384] : memref<4x424xbf16, #tpu.memory_space<vmem>>, vector<4x16xbf16>
    tpu.vector_store %arg10[%c0_9, %c384], %8 {strides = array<i32>} : memref<4x424xbf16, #tpu.memory_space<vmem>>, vector<4x16xbf16>,
    %10 = vector.extract_strided_slice %6 {offsets = [0, 1, 0], sizes = [4, 1, 16], strides = [1, 1, 1]} : vector<4x8x16xbf16> to vector<4x1x16xbf16>
    %11 = vector.shape_cast %10 : vector<4x1x16xbf16> to vector<4x16xbf16>
    %c0_10 = arith.constant 0 : index
    %c400 = arith.constant 400 : index
    %12 = vector.load %arg10[%c0_10, %c400] : memref<4x424xbf16, #tpu.memory_space<vmem>>, vector<4x16xbf16>
    tpu.vector_store %arg10[%c0_10, %c400], %11 {strides = array<i32>} : memref<4x424xbf16, #tpu.memory_space<vmem>>, vector<4x16xbf16>,
    %cst_11 = arith.constant 0.000000e+00 : bf16
    %13 = vector.broadcast %cst_11 : bf16 to vector<4x8xbf16>
    %c0_12 = arith.constant 0 : index
    %c416 = arith.constant 416 : index
    %14 = vector.load %arg10[%c0_12, %c416] : memref<4x424xbf16, #tpu.memory_space<vmem>>, vector<4x8xbf16>
    tpu.vector_store %arg10[%c0_12, %c416], %13 {strides = array<i32>} : memref<4x424xbf16, #tpu.memory_space<vmem>>, vector<4x8xbf16>,
    %c0_13 = arith.constant 0 : index
    %c0_14 = arith.constant 0 : index
    %15 = vector.load %arg4[%c0_13, %c0_14] : memref<1x256xbf16, #tpu.memory_space<vmem>>, vector<1x256xbf16>
    %c0_15 = arith.constant 0 : index
    %c0_16 = arith.constant 0 : index
    %16 = vector.load %arg5[%c0_15, %c0_16] : memref<1x256xbf16, #tpu.memory_space<vmem>>, vector<1x256xbf16>
    %c0_17 = arith.constant 0 : index
    %c127 = arith.constant 127 : index
    %17 = vector.load %arg10[%c0_17, %c127] : memref<4x424xbf16, #tpu.memory_space<vmem>>, vector<4x256xbf16>
    %18 = vector.broadcast %15 : vector<1x256xbf16> to vector<4x256xbf16>
    %19 = arith.mulf %17, %18 : vector<4x256xbf16>
    %c0_18 = arith.constant 0 : index
    %c128_19 = arith.constant 128 : index
    %20 = vector.load %arg10[%c0_18, %c128_19] : memref<4x424xbf16, #tpu.memory_space<vmem>>, vector<4x256xbf16>
    %c0_20 = arith.constant 0 : index
    %c129 = arith.constant 129 : index
    %21 = vector.load %arg10[%c0_20, %c129] : memref<4x424xbf16, #tpu.memory_space<vmem>>, vector<4x256xbf16>
    %22 = vector.broadcast %16 : vector<1x256xbf16> to vector<4x256xbf16>
    %23 = arith.mulf %21, %22 : vector<4x256xbf16>
    %c0_21 = arith.constant 0 : index
    %c143 = arith.constant 143 : index
    %24 = vector.load %arg10[%c0_21, %c143] : memref<4x424xbf16, #tpu.memory_space<vmem>>, vector<4x256xbf16>
    %25 = vector.broadcast %15 : vector<1x256xbf16> to vector<4x256xbf16>
    %26 = arith.mulf %24, %25 : vector<4x256xbf16>
    %c0_22 = arith.constant 0 : index
    %c144 = arith.constant 144 : index
    %27 = vector.load %arg10[%c0_22, %c144] : memref<4x424xbf16, #tpu.memory_space<vmem>>, vector<4x256xbf16>
    %c0_23 = arith.constant 0 : index
    %c145 = arith.constant 145 : index
    %28 = vector.load %arg10[%c0_23, %c145] : memref<4x424xbf16, #tpu.memory_space<vmem>>, vector<4x256xbf16>
    %29 = vector.broadcast %16 : vector<1x256xbf16> to vector<4x256xbf16>
    %30 = arith.mulf %28, %29 : vector<4x256xbf16>
    %c0_24 = arith.constant 0 : index
    %c159 = arith.constant 159 : index
    %31 = vector.load %arg10[%c0_24, %c159] : memref<4x424xbf16, #tpu.memory_space<vmem>>, vector<4x256xbf16>
    %32 = vector.broadcast %15 : vector<1x256xbf16> to vector<4x256xbf16>
    %33 = arith.mulf %31, %32 : vector<4x256xbf16>
    %c0_25 = arith.constant 0 : index
    %c160 = arith.constant 160 : index
    %34 = vector.load %arg10[%c0_25, %c160] : memref<4x424xbf16, #tpu.memory_space<vmem>>, vector<4x256xbf16>
    %c0_26 = arith.constant 0 : index
    %c161 = arith.constant 161 : index
    %35 = vector.load %arg10[%c0_26, %c161] : memref<4x424xbf16, #tpu.memory_space<vmem>>, vector<4x256xbf16>
    %36 = vector.broadcast %16 : vector<1x256xbf16> to vector<4x256xbf16>
    %37 = arith.mulf %35, %36 : vector<4x256xbf16>
    %38 = tpu.concatenate %19, %20, %23, %26, %27, %30, %33, %34, %37 in 0 : vector<4x256xbf16>, vector<4x256xbf16>, vector<4x256xbf16>, vector<4x256xbf16>, vector<4x256xbf16>, vector<4x256xbf16>, vector<4x256xbf16>, vector<4x256xbf16>, vector<4x256xbf16> -> vector<36x256xbf16>
    %c0_27 = arith.constant 0 : index
    %c0_28 = arith.constant 0 : index
    %39 = vector.load %arg6[%c0_27, %c0_28] : memref<8x36xbf16, #tpu.memory_space<vmem>>, vector<8x36xbf16>
    %cst_29 = arith.constant dense<0.000000e+00> : vector<8x256xf32>
    %40 = tpu.matmul %39, %38, %cst_29 {dimension_numbers = #tpu.dot_dimension_numbers<[1], [0], [0], [1], [0, 0, 1, 1], [], []>} : vector<8x36xbf16>, vector<36x256xbf16>, vector<8x256xf32> -> vector<8x256xf32>
    %41 = vector.extract_strided_slice %40 {offsets = [0, 0], sizes = [4, 256], strides = [1, 1]} : vector<8x256xf32> to vector<4x256xf32>
    %cst_30 = arith.constant 0.000000e+00 : f32
    %42 = vector.broadcast %cst_30 : f32 to vector<4x256xf32>
    %43 = arith.maximumf %41, %42 : vector<4x256xf32>
    %44 = vector.extract_strided_slice %40 {offsets = [4, 0], sizes = [4, 256], strides = [1, 1]} : vector<8x256xf32> to vector<4x256xf32>
    %cst_31 = arith.constant 0.000000e+00 : f32
    %45 = vector.broadcast %cst_31 : f32 to vector<4x256xf32>
    %46 = arith.maximumf %44, %45 : vector<4x256xf32>
    %c0_32 = arith.constant 0 : index
    %c0_33 = arith.constant 0 : index
    %47 = vector.load %arg7[%c0_32, %c0_33] : memref<4x4xbf16, #tpu.memory_space<vmem>>, vector<4x4xbf16>
    %48 = arith.truncf %43 : vector<4x256xf32> to vector<4x256xbf16>
    %cst_34 = arith.constant dense<0.000000e+00> : vector<4x256xf32>
    %49 = tpu.matmul %47, %48, %cst_34 {dimension_numbers = #tpu.dot_dimension_numbers<[1], [0], [0], [1], [0, 0, 1, 1], [], []>} : vector<4x4xbf16>, vector<4x256xbf16>, vector<4x256xf32> -> vector<4x256xf32>
    %cst_35 = arith.constant 0.000000e+00 : f32
    %50 = vector.broadcast %cst_35 : f32 to vector<4x256xf32>
    %51 = arith.maximumf %49, %50 : vector<4x256xf32>
    %52 = arith.addf %51, %46 : vector<4x256xf32>
    %cst_36 = arith.constant 0.000000e+00 : f32
    %53 = vector.broadcast %cst_36 : f32 to vector<4x256xf32>
    %54 = arith.maximumf %52, %53 : vector<4x256xf32>
    %c0_37 = arith.constant 0 : index
    %c0_38 = arith.constant 0 : index
    %55 = vector.load %arg8[%c0_37, %c0_38] : memref<4x4xbf16, #tpu.memory_space<vmem>>, vector<4x4xbf16>
    %56 = arith.truncf %54 : vector<4x256xf32> to vector<4x256xbf16>
    %cst_39 = arith.constant dense<0.000000e+00> : vector<4x256xf32>
    %57 = tpu.matmul %55, %56, %cst_39 {dimension_numbers = #tpu.dot_dimension_numbers<[1], [0], [0], [1], [0, 0, 1, 1], [], []>} : vector<4x4xbf16>, vector<4x256xbf16>, vector<4x256xf32> -> vector<4x256xf32>
    %cst_40 = arith.constant 0.000000e+00 : f32
    %58 = vector.broadcast %cst_40 : f32 to vector<4x256xf32>
    %59 = arith.maximumf %57, %58 : vector<4x256xf32>
    %c0_41 = arith.constant 0 : index
    %c0_42 = arith.constant 0 : index
    %c0_43 = arith.constant 0 : index
    %60 = vector.load %arg9[%c0_41, %c0_42, %c0_43] : memref<1x4x256xf32, #tpu.memory_space<vmem>>, vector<1x4x256xf32>
    %61 = vector.shape_cast %60 : vector<1x4x256xf32> to vector<4x256xf32>
    %62 = vector.shape_cast %59 : vector<4x256xf32> to vector<1x4x256xf32>
    tpu.vector_store %arg9[%c0_41, %c0_42, %c0_43], %62 {strides = array<i32>} : memref<1x4x256xf32, #tpu.memory_space<vmem>>, vector<1x4x256xf32>,
    return
  }
  func.func @transform_0(%arg0: i32, %arg1: i32) -> (i32, i32, i32) {
    %c0_i32 = arith.constant 0 : i32
    %c0_i32_0 = arith.constant 0 : i32
    return %arg0, %c0_i32, %arg1 : i32, i32, i32
  }
  func.func @transform_1(%arg0: i32, %arg1: i32) -> (i32, i32, i32, i32) {
    %c1_i32 = arith.constant 1 : i32
    %0 = arith.addi %arg1, %c1_i32 : i32
    %c2_i32 = arith.constant 2 : i32
    %1 = arith.muli %0, %c2_i32 : i32
    %c0_i32 = arith.constant 0 : i32
    %c0_i32_0 = arith.constant 0 : i32
    %c0_i32_1 = arith.constant 0 : i32
    return %arg0, %c0_i32, %1, %c0_i32_0 : i32, i32, i32, i32
  }
  func.func @transform_2(%arg0: i32, %arg1: i32) -> (i32, i32) {
    %c0_i32 = arith.constant 0 : i32
    %c0_i32_0 = arith.constant 0 : i32
    %c0_i32_1 = arith.constant 0 : i32
    return %c0_i32, %c0_i32_0 : i32, i32
  }
  func.func @transform_3(%arg0: i32, %arg1: i32) -> (i32, i32) {
    %c0_i32 = arith.constant 0 : i32
    %c0_i32_0 = arith.constant 0 : i32
    %c0_i32_1 = arith.constant 0 : i32
    return %c0_i32, %c0_i32_0 : i32, i32
  }
  func.func @transform_4(%arg0: i32, %arg1: i32) -> (i32, i32) {
    %c0_i32 = arith.constant 0 : i32
    %c0_i32_0 = arith.constant 0 : i32
    %c0_i32_1 = arith.constant 0 : i32
    return %c0_i32, %c0_i32_0 : i32, i32
  }
  func.func @transform_5(%arg0: i32, %arg1: i32) -> (i32, i32) {
    %c0_i32 = arith.constant 0 : i32
    %c0_i32_0 = arith.constant 0 : i32
    %c0_i32_1 = arith.constant 0 : i32
    return %c0_i32, %c0_i32_0 : i32, i32
  }
  func.func @transform_6(%arg0: i32, %arg1: i32) -> (i32, i32) {
    %c0_i32 = arith.constant 0 : i32
    %c0_i32_0 = arith.constant 0 : i32
    %c0_i32_1 = arith.constant 0 : i32
    return %c0_i32, %c0_i32_0 : i32, i32
  }
  func.func @transform_7(%arg0: i32, %arg1: i32) -> (i32, i32, i32) {
    %c0_i32 = arith.constant 0 : i32
    %c0_i32_0 = arith.constant 0 : i32
    return %arg0, %c0_i32, %arg1 : i32, i32, i32
  }
}

</mosaic_0001>

<llo_original>
// kernel: feature_enhancement.1
$region0: #{feature_enhancement.1}
  #allocation0 [shape = 'u32[]', space=smem, size = 0x4, offset = 0x4, fixed_abs, tag = 'smem constant byte address 0x4 - core index']
  #allocation1 [shape = 'u32[144,128]{1,0:T(1,128)}', space=vmem, size = 0x12000, scoped, tag = 'internal scratch']
  #allocation2 [shape = 'bf16[4,424]{1,0:T(4,128)(2,1)}', space=vmem, size = 0x1000, scoped, tag = 'scratch operand']
  %s0 = inlined_call_operand.vmem [shape: bf16[2,4,384], index: 0, kind: input, shape index: {}]
  %s1 = inlined_call_operand.vmem [shape: bf16[2,4,24,16], index: 1, kind: input, shape index: {}]
  %s2 = inlined_call_operand.vmem [shape: bf16[1,256], index: 2, kind: input, shape index: {}]
  %s3 = inlined_call_operand.vmem [shape: bf16[1,256], index: 3, kind: input, shape index: {}]
  %s4 = inlined_call_operand.vmem [shape: bf16[8,36], index: 4, kind: input, shape index: {}]
  %s5 = inlined_call_operand.vmem [shape: bf16[4,4], index: 5, kind: input, shape index: {}]
  %s6 = inlined_call_operand.vmem [shape: bf16[4,4], index: 6, kind: input, shape index: {}]
  %s7 = inlined_call_operand.vmem [shape: f32[2,4,256], index: 7, kind: output, shape index: {}]
  %s8 = sld [smem:[#allocation0]]
  $region102: #{feature_enhancement.1} parent=0
    _
  %s10 = ssub.s32 1, %s8
  %s11 = scalar_select 0, %s10, %s8
  $region1: #{feature_enhancement.1} parent=0
    #allocation3 [shape = 'u8[16384]{0}', space=vmem, size = 0x4000, scoped, tag = 'input window, operand 1']
    loop: start=0, step=1, limit=4
    $region2: #{feature_enhancement.1} parent=1 // loop_pre_header
      _
    $region3: #{feature_enhancement.1} parent=1 // loop_header
      %s13 = sphi 0, %s17
      %p14 = scmp.ge.s32.totalorder %s13, 4
      %s20 = sphi 0, %s32
      %s21 = sphi 0, %s28
      %s22 = sphi 0, %s20
      %s23 = sphi 0, %s21
      %s24 = sphi 0, %s22
      %s25 = sphi 0, %s23
      %s37 = sphi 0, %s39
      %s40 = sphi 0, %s37
      %s41 = sphi 0, %s40
      %s57 = sphi 0, %s41
      %s69 = sphi 0, %s71
      %s72 = sphi 0, %s69
      %s73 = sphi 0, %s72
      %s89 = sphi 0, %s73
      %s93 = sphi 0, %s93
      %s95 = sphi 0, %s93
      %s96 = sphi 0, %s95
      %s110 = sphi 0, %s96
      %s114 = sphi 0, %s114
      %s116 = sphi 0, %s114
      %s117 = sphi 0, %s116
      %s131 = sphi 0, %s117
      %s135 = sphi 0, %s135
      %s137 = sphi 0, %s135
      %s138 = sphi 0, %s137
      %s152 = sphi 0, %s138
      %s156 = sphi 0, %s156
      %s158 = sphi 0, %s156
      %s159 = sphi 0, %s158
      %s173 = sphi 0, %s159
      %s177 = sphi 0, %s177
      %s179 = sphi 0, %s177
      %s180 = sphi 0, %s179
      %s194 = sphi 0, %s180
      %s202 = sphi 0, %s204
      %s205 = sphi 0, %s202
      %s206 = sphi 0, %s205
      %s222 = sphi 0, %s206
    $region4: #{feature_enhancement.1} parent=1 // loop_header_branch
      %16 = sbr.rel (%p14) target = $region8
    $region5: #{feature_enhancement.1} parent=1 // loop_body
      %s18 = ssub.s32 %s13, 1
      %s19 = ssub.s32 %s13, 2
      %s26 = sadd.s32 1, %s21
      %p27 = scmp.ge.s32.totalorder %s26, 1
      %s28 = scalar_select %p27, 0, %s26
      %s29 = sadd.s32 1, %s20
      %s30 = scalar_select %p27, %s29, %s20
      %p31 = scmp.ge.s32.totalorder %s30, 2
      %s32 = scalar_select %p31, 0, %s30
      %s33 = ssub.s32 %s20, %s32
      %s34 = ssub.s32 %s21, %s28
      %s35 = sor.u32 %s33, %s34
      %p36 = scmp.eq.s32.totalorder %s35, 0
      %s38 = sadd.s32 %s37, 1
      %s39 = scalar_select %p36, %s37, %s38
      %p42 = pneg %p36
      %p43 = scmp.eq.s32.totalorder %s13, 1
      %p44 = por %p42, %p43
      %p45 = scmp.ne.s32.totalorder %s37, %s40
      %p46 = scmp.eq.s32.totalorder %s13, 0
      %p47 = por %p45, %p46
      %p48 = scmp.ne.s32.totalorder %s37, %s40
      %p49 = scmp.eq.s32.totalorder %s18, 1
      %p50 = por %p48, %p49
      %p51 = scmp.ne.s32.totalorder %s40, %s41
      %p52 = scmp.eq.s32.totalorder %s18, 0
      %p53 = por %p51, %p52
      %p54 = scmp.ne.s32.totalorder %s40, %s41
      %p55 = scmp.eq.s32.totalorder %s19, 1
      %p56 = por %p54, %p55
      %p58 = scmp.ne.s32.totalorder %s41, %s57
      %p59 = scmp.eq.s32.totalorder %s19, 0
      %p60 = por %p58, %p59
      %s61 = sadd.s32 %s21, 1
      %s62 = smul.u32 %s61, 2
      %s63 = sadd.s32 %s28, 1
      %s64 = smul.u32 %s63, 2
      %s65 = ssub.s32 %s20, %s32
      %s66 = ssub.s32 %s62, %s64
      %s67 = sor.u32 %s65, %s66
      %p68 = scmp.eq.s32.totalorder %s67, 0
      %s70 = sadd.s32 %s69, 1
      %s71 = scalar_select %p68, %s69, %s70
      %p74 = pneg %p68
      %p75 = scmp.eq.s32.totalorder %s13, 1
      %p76 = por %p74, %p75
      %p77 = scmp.ne.s32.totalorder %s69, %s72
      %p78 = scmp.eq.s32.totalorder %s13, 0
      %p79 = por %p77, %p78
      %p80 = scmp.ne.s32.totalorder %s69, %s72
      %p81 = scmp.eq.s32.totalorder %s18, 1
      %p82 = por %p80, %p81
      %p83 = scmp.ne.s32.totalorder %s72, %s73
      %p84 = scmp.eq.s32.totalorder %s18, 0
      %p85 = por %p83, %p84
      %p86 = scmp.ne.s32.totalorder %s72, %s73
      %p87 = scmp.eq.s32.totalorder %s19, 1
      %p88 = por %p86, %p87
      %p90 = scmp.ne.s32.totalorder %s73, %s89
      %p91 = scmp.eq.s32.totalorder %s19, 0
      %p92 = por %p90, %p91
      %s94 = sadd.s32 %s93, 1
      %p97 = scmp.eq.s32.totalorder %s13, 1
      %p98 = scmp.ne.s32.totalorder %s93, %s95
      %p99 = scmp.eq.s32.totalorder %s13, 0
      %p100 = por %p98, %p99
      %p101 = scmp.ne.s32.totalorder %s93, %s95
      %p102 = scmp.eq.s32.totalorder %s18, 1
      %p103 = por %p101, %p102
      %p104 = scmp.ne.s32.totalorder %s95, %s96
      %p105 = scmp.eq.s32.totalorder %s18, 0
      %p106 = por %p104, %p105
      %p107 = scmp.ne.s32.totalorder %s95, %s96
      %p108 = scmp.eq.s32.totalorder %s19, 1
      %p109 = por %p107, %p108
      %p111 = scmp.ne.s32.totalorder %s96, %s110
      %p112 = scmp.eq.s32.totalorder %s19, 0
      %p113 = por %p111, %p112
      %s115 = sadd.s32 %s114, 1
      %p118 = scmp.eq.s32.totalorder %s13, 1
      %p119 = scmp.ne.s32.totalorder %s114, %s116
      %p120 = scmp.eq.s32.totalorder %s13, 0
      %p121 = por %p119, %p120
      %p122 = scmp.ne.s32.totalorder %s114, %s116
      %p123 = scmp.eq.s32.totalorder %s18, 1
      %p124 = por %p122, %p123
      %p125 = scmp.ne.s32.totalorder %s116, %s117
      %p126 = scmp.eq.s32.totalorder %s18, 0
      %p127 = por %p125, %p126
      %p128 = scmp.ne.s32.totalorder %s116, %s117
      %p129 = scmp.eq.s32.totalorder %s19, 1
      %p130 = por %p128, %p129
      %p132 = scmp.ne.s32.totalorder %s117, %s131
      %p133 = scmp.eq.s32.totalorder %s19, 0
      %p134 = por %p132, %p133
      %s136 = sadd.s32 %s135, 1
      %p139 = scmp.eq.s32.totalorder %s13, 1
      %p140 = scmp.ne.s32.totalorder %s135, %s137
      %p141 = scmp.eq.s32.totalorder %s13, 0
      %p142 = por %p140, %p141
      %p143 = scmp.ne.s32.totalorder %s135, %s137
      %p144 = scmp.eq.s32.totalorder %s18, 1
      %p145 = por %p143, %p144
      %p146 = scmp.ne.s32.totalorder %s137, %s138
      %p147 = scmp.eq.s32.totalorder %s18, 0
      %p148 = por %p146, %p147
      %p149 = scmp.ne.s32.totalorder %s137, %s138
      %p150 = scmp.eq.s32.totalorder %s19, 1
      %p151 = por %p149, %p150
      %p153 = scmp.ne.s32.totalorder %s138, %s152
      %p154 = scmp.eq.s32.totalorder %s19, 0
      %p155 = por %p153, %p154
      %s157 = sadd.s32 %s156, 1
      %p160 = scmp.eq.s32.totalorder %s13, 1
      %p161 = scmp.ne.s32.totalorder %s156, %s158
      %p162 = scmp.eq.s32.totalorder %s13, 0
      %p163 = por %p161, %p162
      %p164 = scmp.ne.s32.totalorder %s156, %s158
      %p165 = scmp.eq.s32.totalorder %s18, 1
      %p166 = por %p164, %p165
      %p167 = scmp.ne.s32.totalorder %s158, %s159
      %p168 = scmp.eq.s32.totalorder %s18, 0
      %p169 = por %p167, %p168
      %p170 = scmp.ne.s32.totalorder %s158, %s159
      %p171 = scmp.eq.s32.totalorder %s19, 1
      %p172 = por %p170, %p171
      %p174 = scmp.ne.s32.totalorder %s159, %s173
      %p175 = scmp.eq.s32.totalorder %s19, 0
      %p176 = por %p174, %p175
      %s178 = sadd.s32 %s177, 1
      %p181 = scmp.eq.s32.totalorder %s13, 1
      %p182 = scmp.ne.s32.totalorder %s177, %s179
      %p183 = scmp.eq.s32.totalorder %s13, 0
      %p184 = por %p182, %p183
      %p185 = scmp.ne.s32.totalorder %s177, %s179
      %p186 = scmp.eq.s32.totalorder %s18, 1
      %p187 = por %p185, %p186
      %p188 = scmp.ne.s32.totalorder %s179, %s180
      %p189 = scmp.eq.s32.totalorder %s18, 0
      %p190 = por %p188, %p189
      %p191 = scmp.ne.s32.totalorder %s179, %s180
      %p192 = scmp.eq.s32.totalorder %s19, 1
      %p193 = por %p191, %p192
      %p195 = scmp.ne.s32.totalorder %s180, %s194
      %p196 = scmp.eq.s32.totalorder %s19, 0
      %p197 = por %p195, %p196
      %s198 = ssub.s32 %s20, %s32
      %s199 = ssub.s32 %s21, %s28
      %s200 = sor.u32 %s198, %s199
      %p201 = scmp.eq.s32.totalorder %s200, 0
      %s203 = sadd.s32 %s202, 1
      %s204 = scalar_select %p201, %s202, %s203
      %p207 = pneg %p201
      %p208 = scmp.eq.s32.totalorder %s13, 1
      %p209 = por %p207, %p208
      %p210 = scmp.ne.s32.totalorder %s202, %s205
      %p211 = scmp.eq.s32.totalorder %s13, 0
      %p212 = por %p210, %p211
      %p213 = scmp.ne.s32.totalorder %s202, %s205
      %p214 = scmp.eq.s32.totalorder %s18, 1
      %p215 = por %p213, %p214
      %p216 = scmp.ne.s32.totalorder %s205, %s206
      %p217 = scmp.eq.s32.totalorder %s18, 0
      %p218 = por %p216, %p217
      %p219 = scmp.ne.s32.totalorder %s205, %s206
      %p220 = scmp.eq.s32.totalorder %s19, 1
      %p221 = por %p219, %p220
      %p223 = scmp.ne.s32.totalorder %s206, %s222
      %p224 = scmp.eq.s32.totalorder %s19, 0
      %p225 = por %p223, %p224
      %p226 = scmp.le.s32.totalorder 1, %s13
      %p227 = scmp.lt.s32.totalorder %s13, 3
      %p228 = pnand %p226, %p227
      %p229 = pneg %p228
      // Predicated region
      $region9: #{feature_enhancement.1} parent=5 // pred_check
        _
      $region10: #{feature_enhancement.1} parent=5 // pred_check_branch
        %231 = sbr.rel (%p228) target = $region12
      $region11: #{feature_enhancement.1} parent=5 // pred_region
        %s232 = ssub.s32 %s13, 1
        // Predicated region
        $region13: #{feature_enhancement.1} parent=11 // pred_check
          %p233 = pneg %p106
        $region14: #{feature_enhancement.1} parent=11 // pred_check_branch
          %235 = sbr.rel (%p233) target = $region16
        $region15: #{feature_enhancement.1} parent=11 // pred_region
          _
        $region16: #{feature_enhancement.1} parent=11 // pred_fallthru
          _
        // Predicated region
        $region17: #{feature_enhancement.1} parent=11 // pred_check
          %p236 = pneg %p127
        $region18: #{feature_enhancement.1} parent=11 // pred_check_branch
          %238 = sbr.rel (%p236) target = $region20
        $region19: #{feature_enhancement.1} parent=11 // pred_region
          _
        $region20: #{feature_enhancement.1} parent=11 // pred_fallthru
          _
        // Predicated region
        $region21: #{feature_enhancement.1} parent=11 // pred_check
          %p239 = pneg %p148
        $region22: #{feature_enhancement.1} parent=11 // pred_check_branch
          %241 = sbr.rel (%p239) target = $region24
        $region23: #{feature_enhancement.1} parent=11 // pred_region
          _
        $region24: #{feature_enhancement.1} parent=11 // pred_fallthru
          _
        // Predicated region
        $region25: #{feature_enhancement.1} parent=11 // pred_check
          %p242 = pneg %p169
        $region26: #{feature_enhancement.1} parent=11 // pred_check_branch
          %244 = sbr.rel (%p242) target = $region28
        $region27: #{feature_enhancement.1} parent=11 // pred_region
          _
        $region28: #{feature_enhancement.1} parent=11 // pred_fallthru
          _
        // Predicated region
        $region29: #{feature_enhancement.1} parent=11 // pred_check
          %p245 = pneg %p190
        $region30: #{feature_enhancement.1} parent=11 // pred_check_branch
          %247 = sbr.rel (%p245) target = $region32
        $region31: #{feature_enhancement.1} parent=11 // pred_region
          _
        $region32: #{feature_enhancement.1} parent=11 // pred_fallthru
          _
      $region12: #{feature_enhancement.1} parent=5 // pred_fallthru
        _
      %p248 = scmp.lt.s32.totalorder %s13, 2
      // Predicated region
      $region33: #{feature_enhancement.1} parent=5 // pred_check
        %p249 = pneg %p248
      $region34: #{feature_enhancement.1} parent=5 // pred_check_branch
        %251 = sbr.rel (%p249) target = $region36
      $region35: #{feature_enhancement.1} parent=5 // pred_region
        // Predicated region
        $region37: #{feature_enhancement.1} parent=35 // pred_check
          %p252 = pneg %p47
        $region38: #{feature_enhancement.1} parent=35 // pred_check_branch
          %254 = sbr.rel (%p252) target = $region40
        $region39: #{feature_enhancement.1} parent=35 // pred_region
          %s255 = smul.u32 2, %s21
          %s256 = ssub.s32 3, %s255
          %p257 = scmp.lt.s32.totalorder %s256, 2
          %s258 = scalar_select %p257, %s256, 2
          %s259 = smul.u32 32, %s258
          %p260 = scmp.lt.s32.totalorder %s20, 1
          %s261 = scalar_select %p260, %s20, 1
          %p262 = scmp.lt.s32.totalorder %s255, 2
          %s263 = scalar_select %p262, %s255, 2
          %s264 = smul.addr %s261, 3
          %s265 = sadd.s32 %s263, %s264
          %s266 = smul.addr %s265, 2
          %s267 = scalar_lea.vmem %s0, %s266
          %s268 = smul.u32 2, %s21
          %s269 = ssub.s32 3, %s268
          %p270 = scmp.lt.s32.totalorder %s269, 2
          %s271 = scalar_select %p270, %s269, 2
          %s272 = smul.u32 32, %s271
        $region40: #{feature_enhancement.1} parent=35 // pred_fallthru
          _
        // Predicated region
        $region41: #{feature_enhancement.1} parent=35 // pred_check
          %p273 = pneg %p79
        $region42: #{feature_enhancement.1} parent=35 // pred_check_branch
          %275 = sbr.rel (%p273) target = $region44
        $region43: #{feature_enhancement.1} parent=35 // pred_region
          %s276 = sand.u32 %s69, 1
          %s277 = sand.u32 %s69, 1
          %s278 = smul.addr %s277, 16
          %s279 = scalar_lea.vmem [#allocation3], %s278
          %s280 = sadd.s32 %s21, 1
          %s281 = smul.u32 %s280, 2
          %s282 = smul.addr %s20, 12
          %s283 = sadd.s32 %s281, %s282
          %s284 = smul.addr %s283, 4
          %s285 = scalar_lea.vmem %s1, %s284
          // Predicated region
          $region45: #{feature_enhancement.1} parent=43 // pred_check
            _
          $region46: #{feature_enhancement.1} parent=43 // pred_check_branch
            %287 = sbr.rel (0) target = $region48
          $region47: #{feature_enhancement.1} parent=43 // pred_region
            // Predicated region
            $region49: #{feature_enhancement.1} parent=47 // pred_check
              _
            $region50: #{feature_enhancement.1} parent=47 // pred_check_branch
              %289 = sbr.rel target = $region52
            $region51: #{feature_enhancement.1} parent=47 // pred_region
              // Predicated region
              $region64: #{feature_enhancement.1} parent=51 // pred_check
                _
              $region65: #{feature_enhancement.1} parent=51 // pred_check_branch
                %311 = sbr.rel (0) target = $region67
              $region66: #{feature_enhancement.1} parent=51 // pred_region
                loop: start=0, step=1, limit=1
                $region68: #{feature_enhancement.1} parent=66 // loop_pre_header
                  _
                $region69: #{feature_enhancement.1} parent=66 // loop_header
                  %s313 = sphi 0, %s317
                  %p314 = scmp.ge.s32.totalorder %s313, 1
                  %s318 = sphi %s285, %s285
                  %s319 = sphi %s279, %s279
                $region70: #{feature_enhancement.1} parent=66 // loop_header_branch
                  %316 = sbr.rel (%p314) target = $region74
                $region71: #{feature_enhancement.1} parent=66 // loop_body
                  _
                $region72: #{feature_enhancement.1} parent=66 // loop_footer
                  %s317 = sadd.s32 1, %s313
                $region73: #{feature_enhancement.1} parent=66 // loop_footer_branch
                  %312 = sbr.rel target = $region69
                $region74: #{feature_enhancement.1} parent=66 // loop_exit
                  _
                %s321 = ssub.s32 16, 1
                loop: start=0, step=1, limit=1
                $region75: #{feature_enhancement.1} parent=66 // loop_pre_header
                  _
                $region76: #{feature_enhancement.1} parent=66 // loop_header
                  %s323 = sphi 0, %s327
                  %p324 = scmp.ge.s32.totalorder %s323, 1
                  %s328 = sphi %s285, %s285
                  %s329 = sphi %s279, %s279
                $region77: #{feature_enhancement.1} parent=66 // loop_header_branch
                  %326 = sbr.rel (%p324) target = $region81
                $region78: #{feature_enhancement.1} parent=66 // loop_body
                  %v330 = vld [vmem:[%s328] sm:%s321]
                  %331 = vst [vmem:[%s329] sm:%s321] %v330
                  %v332 = vld [vmem:[%s328 + $0xc] sm:%s321]
                  %333 = vst [vmem:[%s329 + $0x4] sm:%s321] %v332
                  %v334 = vld [vmem:[%s328 + $0x18] sm:%s321]
                  %335 = vst [vmem:[%s329 + $0x8] sm:%s321] %v334
                  %v336 = vld [vmem:[%s328 + $0x24] sm:%s321]
                  %337 = vst [vmem:[%s329 + $0xc] sm:%s321] %v336
                $region79: #{feature_enhancement.1} parent=66 // loop_footer
                  %s327 = sadd.s32 1, %s323
                $region80: #{feature_enhancement.1} parent=66 // loop_footer_branch
                  %322 = sbr.rel target = $region76
                $region81: #{feature_enhancement.1} parent=66 // loop_exit
                  _
              $region67: #{feature_enhancement.1} parent=51 // pred_fallthru
                _
            $region52: #{feature_enhancement.1} parent=47 // pred_fallthru
              _
            // Predicated region
            $region53: #{feature_enhancement.1} parent=47 // pred_check
              _
            $region54: #{feature_enhancement.1} parent=47 // pred_check_branch
              %291 = sbr.rel (0) target = $region56
            $region55: #{feature_enhancement.1} parent=47 // pred_region
              %s293 = ssub.s32 16, 1
              loop: start=0, step=1, limit=1
              $region57: #{feature_enhancement.1} parent=55 // loop_pre_header
                _
              $region58: #{feature_enhancement.1} parent=55 // loop_header
                %s295 = sphi 0, %s299
                %p296 = scmp.ge.s32.totalorder %s295, 1
                %s300 = sphi %s285, %s285
                %s301 = sphi %s279, %s279
              $region59: #{feature_enhancement.1} parent=55 // loop_header_branch
                %298 = sbr.rel (%p296) target = $region63
              $region60: #{feature_enhancement.1} parent=55 // loop_body
                %v302 = vld [vmem:[%s300] sm:%s293]
                %303 = vst [vmem:[%s301] sm:%s293] %v302
                %v304 = vld [vmem:[%s300 + $0xc] sm:%s293]
                %305 = vst [vmem:[%s301 + $0x4] sm:%s293] %v304
                %v306 = vld [vmem:[%s300 + $0x18] sm:%s293]
                %307 = vst [vmem:[%s301 + $0x8] sm:%s293] %v306
                %v308 = vld [vmem:[%s300 + $0x24] sm:%s293]
                %309 = vst [vmem:[%s301 + $0xc] sm:%s293] %v308
              $region61: #{feature_enhancement.1} parent=55 // loop_footer
                %s299 = sadd.s32 1, %s295
              $region62: #{feature_enhancement.1} parent=55 // loop_footer_branch
                %294 = sbr.rel target = $region58
              $region63: #{feature_enhancement.1} parent=55 // loop_exit
                _
            $region56: #{feature_enhancement.1} parent=47 // pred_fallthru
              _
          $region48: #{feature_enhancement.1} parent=43 // pred_fallthru
            _
          %338 = vnop
        $region44: #{feature_enhancement.1} parent=35 // pred_fallthru
          _
      $region36: #{feature_enhancement.1} parent=5 // pred_fallthru
        _
      %p339 = scmp.le.s32.totalorder 1, %s13
      %p340 = scmp.lt.s32.totalorder %s13, 3
      %p341 = pnand %p339, %p340
      %p342 = pneg %p341
      // Predicated region
      $region82: #{feature_enhancement.1} parent=5 // pred_check
        _
      $region83: #{feature_enhancement.1} parent=5 // pred_check_branch
        %344 = sbr.rel (%p341) target = $region85
      $region84: #{feature_enhancement.1} parent=5 // pred_region
        %s345 = ssub.s32 %s13, 1
        %s346 = sand.u32 %s72, 1
        %s347 = sand.u32 %s72, 1
        %s348 = smul.addr %s347, 16
        %s349 = scalar_lea.vmem [#allocation3], %s348
        // Predicated region
        $region86: #{feature_enhancement.1} parent=84 // pred_check
          %p350 = pneg %p85
        $region87: #{feature_enhancement.1} parent=84 // pred_check_branch
          %352 = sbr.rel (%p350) target = $region89
        $region88: #{feature_enhancement.1} parent=84 // pred_region
          _
        $region89: #{feature_enhancement.1} parent=84 // pred_fallthru
          _
        %s353 = smul.u32 2, %s23
        %s354 = ssub.s32 3, %s353
        %p355 = scmp.lt.s32.totalorder %s354, 2
        %s356 = scalar_select %p355, %s354, 2
        %s357 = smul.u32 32, %s356
        %p358 = scmp.lt.s32.totalorder %s22, 1
        %s359 = scalar_select %p358, %s22, 1
        %p360 = scmp.lt.s32.totalorder %s353, 2
        %s361 = scalar_select %p360, %s353, 2
        %s362 = smul.addr %s359, 3
        %s363 = sadd.s32 %s361, %s362
        %s364 = smul.addr %s363, 2
        %s365 = scalar_lea.vmem %s0, %s364
        %p366 = pneg %p53
        %p367 = pneg %p50
        %s368 = sand.u32 %s72, 1
        %s369 = sand.u32 %s72, 1
        %s370 = smul.addr %s369, 16
        %s371 = scalar_lea.vmem [#allocation3], %s370
        %p372 = pneg %p85
        %p373 = pneg %p82
        %p374 = pneg %p106
        %p375 = pneg %p103
        %p376 = pneg %p127
        %p377 = pneg %p124
        %p378 = pneg %p148
        %p379 = pneg %p145
        %p380 = pneg %p169
        %p381 = pneg %p166
        %p382 = pneg %p190
        %p383 = pneg %p187
        %p384 = pneg %p218
        %p385 = pneg %p215
        %s386 = smul.u32 2, %s23
        %p387 = scmp.lt.s32.totalorder %s22, 1
        %s388 = scalar_select %p387, %s22, 1
        %p389 = scmp.lt.s32.totalorder %s386, 1
        %s390 = scalar_select %p389, %s386, 1
        %s391 = smul.addr %s388, 2
        %s392 = sadd.s32 %s390, %s391
        %s393 = smul.addr %s392, 4
        %s394 = scalar_lea.vmem %s7, %s393
        %s395 = smul.u32 2, %s23
        %s396 = ssub.s32 3, %s395
        %p397 = scmp.lt.s32.totalorder %s396, 2
        %s398 = scalar_select %p397, %s396, 2
        %s399 = smul.u32 32, %s398
        %p400 = scmp.lt.s32.totalorder %s22, 1
        %s401 = scalar_select %p400, %s22, 1
        %p402 = scmp.lt.s32.totalorder %s395, 2
        %s403 = scalar_select %p402, %s395, 2
        %s404 = smul.addr %s401, 3
        %s405 = sadd.s32 %s403, %s404
        %s406 = smul.addr %s405, 2
        %s407 = scalar_lea.vmem %s0, %s406
        %s408 = smul.u32 2, %s23
        %s409 = ssub.s32 3, %s408
        %p410 = scmp.lt.s32.totalorder %s409, 2
        %s411 = scalar_select %p410, %s409, 2
        %s412 = smul.u32 32, %s411
        %s413 = sadd.s32 %s23, 1
        %s414 = smul.u32 %s413, 2
        %s415 = smul.u32 2, %s23
        %p416 = scmp.lt.s32.totalorder %s22, 1
        %s417 = scalar_select %p416, %s22, 1
        %p418 = scmp.lt.s32.totalorder %s415, 1
        %s419 = scalar_select %p418, %s415, 1
        %s420 = smul.addr %s417, 2
        %s421 = sadd.s32 %s419, %s420
        %s422 = smul.addr %s421, 4
        %s423 = scalar_lea.vmem %s7, %s422
        %s424 = smul.u32 2, %s23
        %426 = vst [vmem:[#allocation2] sm:$0x3] 0
        %v427 = vld [vmem:[%s407] sm:$0xf]
        %428 = vst [vmem:[#allocation2 + $0x2] sm:$0xf] %v427
        %v429 = vld [vmem:[%s349] sm:$0xf]
        %v430 = vld [vmem:[%s349 + $0x4] sm:$0xf]
        %v431 = vld [vmem:[%s349 + $0x8] sm:$0xf]
        %v432 = vld [vmem:[%s349 + $0xc] sm:$0xf]
        %v438 = vunpack.c.l.s4 1983009808
        %v439 = vunpack.c.0.s8 %v438
        %v440 = vlaneseq
        %v441 = vshrl.u32 %v440, 7
        %v442 = vsub.s32 %v439, %v441
        %v443 = vrot.slane %v429, %v442
        %v445 = vunpack.c.l.s4 1983009808
        %v446 = vunpack.c.0.s8 %v445
        %v447 = vlaneseq
        %v448 = vshrl.u32 %v447, 7
        %v449 = vsub.s32 %v446, %v448
        %v450 = vrot.slane %v430, %v449
        %v452 = vunpack.c.l.s4 1983009808
        %v453 = vunpack.c.0.s8 %v452
        %v454 = vlaneseq
        %v455 = vshrl.u32 %v454, 7
        %v456 = vsub.s32 %v453, %v455
        %v457 = vrot.slane %v431, %v456
        %v459 = vunpack.c.l.s4 1983009808
        %v460 = vunpack.c.0.s8 %v459
        %v461 = vlaneseq
        %v462 = vshrl.u32 %v461, 7
        %v463 = vsub.s32 %v460, %v462
        %v464 = vrot.slane %v432, %v463
        %v466 = vunpack.c.l.s4 1983009808
        %v467 = vunpack.c.0.s8 %v466
        %v468 = vlaneseq
        %v469 = vshrl.u32 %v468, 7
        %v470 = vsub.s32 %v467, %v469
        %v471 = vrot.slane %v443, %v470
        %v473 = vunpack.c.l.s4 1983009808
        %v474 = vunpack.c.0.s8 %v473
        %v475 = vlaneseq
        %v476 = vshrl.u32 %v475, 7
        %v477 = vsub.s32 %v474, %v476
        %v478 = vrot.slane %v450, %v477
        %v480 = vunpack.c.l.s4 1983009808
        %v481 = vunpack.c.0.s8 %v480
        %v482 = vlaneseq
        %v483 = vshrl.u32 %v482, 7
        %v484 = vsub.s32 %v481, %v483
        %v485 = vrot.slane %v457, %v484
        %v487 = vunpack.c.l.s4 1983009808
        %v488 = vunpack.c.0.s8 %v487
        %v489 = vlaneseq
        %v490 = vshrl.u32 %v489, 7
        %v491 = vsub.s32 %v488, %v490
        %v492 = vrot.slane %v464, %v491
        %v493 = vunpack.c.l.b16 %v471
        %v494 = vunpack.c.l.b16 %v478
        %v495 = vunpack.c.l.b16 %v485
        %v496 = vunpack.c.l.b16 %v492
        %v497 = vrot.slane %v494, 7
        %vm498 = vcmask 1041409
        %v499 = vsel %vm498, %v497, %v493
        %v500 = vrot.slane %v495, 6
        %vm501 = vcmask 1042434
        %v502 = vsel %vm501, %v500, %v499
        %v503 = vrot.slane %v496, 5
        %vm504 = vcmask 1043459
        %v505 = vsel %vm504, %v503, %v502
        %v506 = vpack.c.b16 %v505, %v505
        %v508 = vunpack.c.l.s4 1983009808
        %v509 = vunpack.c.0.s8 %v508
        %v510 = vlaneseq
        %v511 = vshrl.u32 %v510, 7
        %v512 = vsub.s32 %v509, %v511
        %v513 = vrot.slane %v506, %v512
        %vm515 = vcmask 123904
        %516 = vst.msk [vmem:[#allocation2 + $0x6] sm:$0x3] %vm515, %v513
        %v517 = vrot.slane %v493, 1
        %v518 = vsel %vm498, %v494, %v517
        %v519 = vrot.slane %v495, 7
        %v520 = vsel %vm501, %v519, %v518
        %v521 = vrot.slane %v496, 6
        %v522 = vsel %vm504, %v521, %v520
        %v523 = vpack.c.b16 %v522, %v522
        %v525 = vunpack.c.l.s4 1983009808
        %v526 = vunpack.c.0.s8 %v525
        %v527 = vlaneseq
        %v528 = vshrl.u32 %v527, 7
        %v529 = vsub.s32 %v526, %v528
        %v530 = vrot.slane %v523, %v529
        %531 = vrot.lane.b32.xlu0 %v530, 16
        %v532 = vpop.permute.xlu0 %531
        %vm534 = vcmask 255104
        %535 = vst.msk [vmem:[#allocation2 + $0x6] sm:$0x3] %vm534, %v532
        %vm536 = vcmask 320768
        %537 = vst.msk [vmem:[#allocation2 + $0x6] sm:$0x3] %vm536, 0
        %v538 = vld [vmem:[%s2] sm:$0x3]
        %v539 = vld [vmem:[%s3] sm:$0x3]
        %v540 = vld [vmem:[#allocation2] sm:$0x3f]
        %v543 = vunpack.c.l.s4 1966171168
        %v544 = vunpack.c.0.s8 %v543
        %v545 = vlaneseq
        %v546 = vshrl.u32 %v545, 7
        %v547 = vsub.s32 %v544, %v546
        %v548 = vrot.slane %v538, %v547
        %v549 = vcombine.high %v548, %v548
        %v551 = vunpack.c.l.s4 1966171168
        %v552 = vunpack.c.0.s8 %v551
        %v553 = vlaneseq
        %v554 = vshrl.u32 %v553, 7
        %v555 = vsub.s32 %v552, %v554
        %v556 = vrot.slane %v548, %v555
        %v558 = vunpack.c.l.s4 1966171168
        %v559 = vunpack.c.0.s8 %v558
        %v560 = vlaneseq
        %v561 = vshrl.u32 %v560, 7
        %v562 = vsub.s32 %v559, %v561
        %v563 = vrot.slane %v549, %v562
        %v565 = vpack.i.b16 %v556, %v556
        %v567 = vlaneseq
        %v568 = vshrl.u32 %v567, 7
        %v569 = vsub.s32 0, %v568
        %v570 = vrot.slane %v565, %v569
        %v572 = vpack.i.b16 %v563, %v563
        %v574 = vlaneseq
        %v575 = vshrl.u32 %v574, 7
        %v576 = vsub.s32 0, %v575
        %v577 = vrot.slane %v572, %v576
        %v580 = vcombine.low %v570, %v577
        %v582 = vunpack.c.l.s4 1983009808
        %v583 = vunpack.c.0.s8 %v582
        %v584 = vlaneseq
        %v585 = vshrl.u32 %v584, 7
        %v586 = vsub.s32 %v583, %v585
        %v587 = vrot.slane %v580, %v586
        %588 = vrot.lane.b32.xlu0 %v587, 127
        %v589 = vpop.permute.xlu0 %588
        %v590 = vrot.slane %v589, 6
        %vm591 = vcmask 1039360
        %v592 = vsel %vm591, %v590, %v589
        %v594 = vmul.bf16 %v540, %v592
        %v595 = vld [vmem:[#allocation2 + $0x2] sm:$0xf]
        %v596 = vld [vmem:[#allocation2 + $0x2] sm:$0x3f]
        %v599 = vunpack.c.l.s4 1966171168
        %v600 = vunpack.c.0.s8 %v599
        %v601 = vlaneseq
        %v602 = vshrl.u32 %v601, 7
        %v603 = vsub.s32 %v600, %v602
        %v604 = vrot.slane %v539, %v603
        %v605 = vcombine.high %v604, %v604
        %v607 = vunpack.c.l.s4 1966171168
        %v608 = vunpack.c.0.s8 %v607
        %v609 = vlaneseq
        %v610 = vshrl.u32 %v609, 7
        %v611 = vsub.s32 %v608, %v610
        %v612 = vrot.slane %v604, %v611
        %v614 = vunpack.c.l.s4 1966171168
        %v615 = vunpack.c.0.s8 %v614
        %v616 = vlaneseq
        %v617 = vshrl.u32 %v616, 7
        %v618 = vsub.s32 %v615, %v617
        %v619 = vrot.slane %v605, %v618
        %v621 = vpack.i.b16 %v612, %v612
        %v623 = vlaneseq
        %v624 = vshrl.u32 %v623, 7
        %v625 = vsub.s32 0, %v624
        %v626 = vrot.slane %v621, %v625
        %v628 = vpack.i.b16 %v619, %v619
        %v630 = vlaneseq
        %v631 = vshrl.u32 %v630, 7
        %v632 = vsub.s32 0, %v631
        %v633 = vrot.slane %v628, %v632
        %v636 = vcombine.low %v626, %v633
        %v638 = vunpack.c.l.s4 1983009808
        %v639 = vunpack.c.0.s8 %v638
        %v640 = vlaneseq
        %v641 = vshrl.u32 %v640, 7
        %v642 = vsub.s32 %v639, %v641
        %v643 = vrot.slane %v636, %v642
        %644 = vrot.lane.b32.xlu0 %v643, 1
        %v645 = vpop.permute.xlu0 %644
        %v646 = vrot.slane %v645, 6
        %vm647 = vcmask 7168
        %v648 = vsel %vm647, %v646, %v645
        %v650 = vmul.bf16 %v596, %v648
        %651 = vrot.lane.b32.xlu0 %v587, 15
        %v652 = vpop.permute.xlu0 %651
        %v653 = vrot.slane %v652, 6
        %vm654 = vcmask 121856
        %v655 = vsel %vm654, %v653, %v652
        %v657 = vmul.bf16 %v596, %v655
        %658 = vrot.lane.b32.xlu0 %v643, 17
        %v659 = vpop.permute.xlu0 %658
        %v660 = vrot.slane %v659, 6
        %vm661 = vcmask 138240
        %v662 = vsel %vm661, %v660, %v659
        %v664 = vmul.bf16 %v596, %v662
        %665 = vrot.lane.b32.xlu0 %v587, 31
        %v666 = vpop.permute.xlu0 %665
        %v667 = vrot.slane %v666, 6
        %vm668 = vcmask 252928
        %v669 = vsel %vm668, %v667, %v666
        %v671 = vmul.bf16 %v596, %v669
        %672 = vrot.lane.b32.xlu0 %v643, 33
        %v673 = vpop.permute.xlu0 %672
        %v674 = vrot.slane %v673, 6
        %vm675 = vcmask 269312
        %v676 = vsel %vm675, %v674, %v673
        %v678 = vmul.bf16 %v596, %v676
        %v680 = vcombine.high %v594, %v594
        %v682 = vunpack.c.l.s4 1983009808
        %v683 = vunpack.c.0.s8 %v682
        %v684 = vlaneseq
        %v685 = vshrl.u32 %v684, 7
        %v686 = vsub.s32 %v683, %v685
        %v687 = vrot.slane %v594, %v686
        %v689 = vunpack.c.l.s4 1983009808
        %v690 = vunpack.c.0.s8 %v689
        %v691 = vlaneseq
        %v692 = vshrl.u32 %v691, 7
        %v693 = vsub.s32 %v690, %v692
        %v694 = vrot.slane %v680, %v693
        %v695 = vcombine.high %v687, %v687
        %v697 = vcombine.low %v595, %v595
        %v699 = vunpack.c.l.s4 1983009808
        %v700 = vunpack.c.0.s8 %v699
        %v701 = vlaneseq
        %v702 = vshrl.u32 %v701, 7
        %v703 = vsub.s32 %v700, %v702
        %v704 = vrot.slane %v697, %v703
        %v705 = vcombine.high %v704, %v704
        %706 = vrot.lane.b32.xlu0 %v704, 127
        %v707 = vpop.permute.xlu0 %706
        %708 = vrot.lane.b32.xlu0 %v705, 127
        %v709 = vpop.permute.xlu0 %708
        %v710 = vsel %vm591, %v707, %v709
        %v712 = vcombine.high %v650, %v650
        %v714 = vunpack.c.l.s4 1983009808
        %v715 = vunpack.c.0.s8 %v714
        %v716 = vlaneseq
        %v717 = vshrl.u32 %v716, 7
        %v718 = vsub.s32 %v715, %v717
        %v719 = vrot.slane %v650, %v718
        %v721 = vunpack.c.l.s4 1983009808
        %v722 = vunpack.c.0.s8 %v721
        %v723 = vlaneseq
        %v724 = vshrl.u32 %v723, 7
        %v725 = vsub.s32 %v722, %v724
        %v726 = vrot.slane %v712, %v725
        %v727 = vcombine.low %v719, %v719
        %v728 = vcombine.low %v726, %v726
        %729 = vrot.lane.b32.xlu0 %v727, 126
        %v730 = vpop.permute.xlu0 %729
        %731 = vrot.lane.b32.xlu0 %v719, 126
        %v732 = vpop.permute.xlu0 %731
        %733 = vrot.lane.b32.xlu0 %v728, 126
        %v734 = vpop.permute.xlu0 %733
        %vm735 = vcmask 1031168
        %v736 = vsel %vm735, %v730, %v732
        %v737 = vsel %vm735, %v732, %v734
        %v739 = vcombine.low %v657, %v657
        %v741 = vunpack.c.l.s4 1983009808
        %v742 = vunpack.c.0.s8 %v741
        %v743 = vlaneseq
        %v744 = vshrl.u32 %v743, 7
        %v745 = vsub.s32 %v742, %v744
        %v746 = vrot.slane %v739, %v745
        %v748 = vunpack.c.l.s4 1983009808
        %v749 = vunpack.c.0.s8 %v748
        %v750 = vlaneseq
        %v751 = vshrl.u32 %v750, 7
        %v752 = vsub.s32 %v749, %v751
        %v753 = vrot.slane %v657, %v752
        %v754 = vcombine.low %v746, %v746
        %v755 = vcombine.low %v753, %v753
        %756 = vrot.lane.b32.xlu0 %v754, 112
        %v757 = vpop.permute.xlu0 %756
        %758 = vrot.lane.b32.xlu0 %v746, 112
        %v759 = vpop.permute.xlu0 %758
        %760 = vrot.lane.b32.xlu0 %v755, 112
        %v761 = vpop.permute.xlu0 %760
        %vm762 = vcmask 916480
        %v763 = vsel %vm762, %v757, %v759
        %v764 = vsel %vm762, %v759, %v761
        %v766 = vcombine.high %v596, %v596
        %v768 = vunpack.c.l.s4 1983009808
        %v769 = vunpack.c.0.s8 %v768
        %v770 = vlaneseq
        %v771 = vshrl.u32 %v770, 7
        %v772 = vsub.s32 %v769, %v771
        %v773 = vrot.slane %v596, %v772
        %v775 = vunpack.c.l.s4 1983009808
        %v776 = vunpack.c.0.s8 %v775
        %v777 = vlaneseq
        %v778 = vshrl.u32 %v777, 7
        %v779 = vsub.s32 %v776, %v778
        %v780 = vrot.slane %v766, %v779
        %v781 = vcombine.high %v773, %v773
        %782 = vrot.lane.b32.xlu0 %v773, 111
        %v783 = vpop.permute.xlu0 %782
        %784 = vrot.lane.b32.xlu0 %v781, 111
        %v785 = vpop.permute.xlu0 %784
        %786 = vrot.lane.b32.xlu0 %v780, 111
        %v787 = vpop.permute.xlu0 %786
        %vm788 = vcmask 908288
        %v789 = vsel %vm788, %v783, %v785
        %v790 = vsel %vm788, %v785, %v787
        %v792 = vcombine.low %v664, %v664
        %v794 = vunpack.c.l.s4 1983009808
        %v795 = vunpack.c.0.s8 %v794
        %v796 = vlaneseq
        %v797 = vshrl.u32 %v796, 7
        %v798 = vsub.s32 %v795, %v797
        %v799 = vrot.slane %v792, %v798
        %v801 = vunpack.c.l.s4 1983009808
        %v802 = vunpack.c.0.s8 %v801
        %v803 = vlaneseq
        %v804 = vshrl.u32 %v803, 7
        %v805 = vsub.s32 %v802, %v804
        %v806 = vrot.slane %v664, %v805
        %v807 = vcombine.high %v799, %v799
        %808 = vrot.lane.b32.xlu0 %v799, 110
        %v809 = vpop.permute.xlu0 %808
        %810 = vrot.lane.b32.xlu0 %v807, 110
        %v811 = vpop.permute.xlu0 %810
        %812 = vrot.lane.b32.xlu0 %v806, 110
        %v813 = vpop.permute.xlu0 %812
        %vm814 = vcmask 900096
        %v815 = vsel %vm814, %v809, %v811
        %v816 = vsel %vm814, %v811, %v813
        %v818 = vcombine.high %v671, %v671
        %v820 = vunpack.c.l.s4 1983009808
        %v821 = vunpack.c.0.s8 %v820
        %v822 = vlaneseq
        %v823 = vshrl.u32 %v822, 7
        %v824 = vsub.s32 %v821, %v823
        %v825 = vrot.slane %v671, %v824
        %v827 = vunpack.c.l.s4 1983009808
        %v828 = vunpack.c.0.s8 %v827
        %v829 = vlaneseq
        %v830 = vshrl.u32 %v829, 7
        %v831 = vsub.s32 %v828, %v830
        %v832 = vrot.slane %v818, %v831
        %v833 = vcombine.low %v825, %v825
        %v834 = vcombine.low %v832, %v832
        %835 = vrot.lane.b32.xlu0 %v833, 96
        %v836 = vpop.permute.xlu0 %835
        %837 = vrot.lane.b32.xlu0 %v825, 96
        %v838 = vpop.permute.xlu0 %837
        %839 = vrot.lane.b32.xlu0 %v834, 96
        %v840 = vpop.permute.xlu0 %839
        %vm841 = vcmask 785408
        %v842 = vsel %vm841, %v836, %v838
        %v843 = vsel %vm841, %v838, %v840
        %v844 = vcombine.low %v596, %v596
        %v846 = vunpack.c.l.s4 1983009808
        %v847 = vunpack.c.0.s8 %v846
        %v848 = vlaneseq
        %v849 = vshrl.u32 %v848, 7
        %v850 = vsub.s32 %v847, %v849
        %v851 = vrot.slane %v844, %v850
        %v852 = vcombine.low %v851, %v851
        %v853 = vcombine.low %v773, %v773
        %854 = vrot.lane.b32.xlu0 %v852, 95
        %v855 = vpop.permute.xlu0 %854
        %856 = vrot.lane.b32.xlu0 %v851, 95
        %v857 = vpop.permute.xlu0 %856
        %858 = vrot.lane.b32.xlu0 %v853, 95
        %v859 = vpop.permute.xlu0 %858
        %vm860 = vcmask 777216
        %v861 = vsel %vm860, %v855, %v857
        %v862 = vsel %vm860, %v857, %v859
        %v864 = vcombine.high %v678, %v678
        %v866 = vunpack.c.l.s4 1983009808
        %v867 = vunpack.c.0.s8 %v866
        %v868 = vlaneseq
        %v869 = vshrl.u32 %v868, 7
        %v870 = vsub.s32 %v867, %v869
        %v871 = vrot.slane %v678, %v870
        %v873 = vunpack.c.l.s4 1983009808
        %v874 = vunpack.c.0.s8 %v873
        %v875 = vlaneseq
        %v876 = vshrl.u32 %v875, 7
        %v877 = vsub.s32 %v874, %v876
        %v878 = vrot.slane %v864, %v877
        %v879 = vcombine.high %v871, %v871
        %880 = vrot.lane.b32.xlu0 %v871, 94
        %v881 = vpop.permute.xlu0 %880
        %882 = vrot.lane.b32.xlu0 %v879, 94
        %v883 = vpop.permute.xlu0 %882
        %884 = vrot.lane.b32.xlu0 %v878, 94
        %v885 = vpop.permute.xlu0 %884
        %vm886 = vcmask 769024
        %v887 = vsel %vm886, %v881, %v883
        %v888 = vsel %vm886, %v883, %v885
        %vm889 = vcmask 1041408
        %v892 = vsel %vm889, %v687, %v707
        %v895 = vsel %vm889, %v695, %v710
        %v898 = vsel %vm889, %v694, %v709
        %vm899 = vcmask 1043456
        %v901 = vsel %vm899, %v892, %v730
        %v903 = vsel %vm899, %v895, %v736
        %v905 = vsel %vm899, %v898, %v737
        %vm906 = vcmask 1045504
        %v908 = vsel %vm906, %v901, %v757
        %v910 = vsel %vm906, %v903, %v763
        %v912 = vsel %vm906, %v905, %v764
        %v915 = vsel %vm889, %v783, %v809
        %v918 = vsel %vm889, %v789, %v815
        %v921 = vsel %vm889, %v790, %v816
        %v923 = vsel %vm899, %v915, %v836
        %v925 = vsel %vm899, %v918, %v842
        %v927 = vsel %vm899, %v921, %v843
        %v929 = vsel %vm906, %v923, %v855
        %v931 = vsel %vm906, %v925, %v861
        %v933 = vsel %vm906, %v927, %v862
        %v934 = vld [vmem:[%s4] sm:$0xf]
        %941 = vrot.lane.b32.xlu0 %v908, 1
        %v942 = vpop.permute.xlu0 %941
        %943 = vrot.lane.b32.xlu0 %v910, 1
        %v944 = vpop.permute.xlu0 %943
        %945 = vrot.lane.b32.xlu0 %v912, 1
        %v946 = vpop.permute.xlu0 %945
        %947 = vrot.lane.b32.xlu0 %v929, 1
        %v948 = vpop.permute.xlu0 %947
        %949 = vrot.lane.b32.xlu0 %v931, 1
        %v950 = vpop.permute.xlu0 %949
        %951 = vrot.lane.b32.xlu0 %v933, 1
        %v952 = vpop.permute.xlu0 %951
        %953 = vrot.lane.b32.xlu0 %v881, 1
        %v954 = vpop.permute.xlu0 %953
        %955 = vrot.lane.b32.xlu0 %v887, 1
        %v956 = vpop.permute.xlu0 %955
        %957 = vrot.lane.b32.xlu0 %v888, 1
        %v958 = vpop.permute.xlu0 %957
        %v959 = vsel %vm647, %v942, %v944
        %v960 = vsel %vm647, %v944, %v946
        %v961 = vsel %vm647, %v948, %v950
        %v962 = vsel %vm647, %v950, %v952
        %v963 = vsel %vm647, %v954, %v956
        %v964 = vsel %vm647, %v956, %v958
        %vm969 = vcmask 293888
        %v971 = vsel %vm969, %v934, 0
        %v974 = vsel %vm889, %v963, 0
        %v977 = vsel %vm889, %v964, 0
        %979 = vmatprep.subr.bf16.mxu0 0
        %980 = vmatpush1.bf16.msra.mxu0 0
        %981 = vmatprep.subr.bf16.mxu0 0
        %982 = vmatpush1.bf16.msra.mxu0 0
        %983 = vmatprep.subr.bf16.mxu0 0
        %984 = vmatpush1.bf16.msra.mxu0 0
        %985 = vmatprep.subr.bf16.mxu0 0
        %986 = vmatpush1.bf16.msra.mxu0 0
        %987 = vmatprep.subr.bf16.mxu0 0
        %988 = vmatpush1.bf16.msra.mxu0 0
        %989 = vmatprep.subr.bf16.mxu0 %v977
        %990 = vmatpush1.bf16.msra.mxu0 %v974
        %991 = vmatprep.subr.bf16.mxu0 %v962
        %992 = vmatpush1.bf16.msra.mxu0 %v961
        %993 = vmatprep.subr.bf16.mxu0 %v960
        %994 = vmatpush1.bf16.msra.mxu0 %v959
        %995 = vmatprep.subr.bf16.mxu0 0
        %996 = vmatpush2.bf16.msra.mxu0 0
        %997 = vmatprep.subr.bf16.mxu0 0
        %998 = vmatpush2.bf16.msra.mxu0 0
        %999 = vmatprep.subr.bf16.mxu0 0
        %1000 = vmatpush2.bf16.msra.mxu0 0
        %1001 = vmatprep.subr.bf16.mxu0 0
        %1002 = vmatpush2.bf16.msra.mxu0 0
        %1003 = vmatprep.subr.bf16.mxu0 0
        %1004 = vmatpush2.bf16.msra.mxu0 0
        %1005 = vmatprep.subr.bf16.mxu0 0
        %1006 = vmatpush2.bf16.msra.mxu0 0
        %1007 = vmatprep.subr.bf16.mxu0 0
        %1008 = vmatpush2.bf16.msra.mxu0 0
        %1009 = vmatprep.subr.bf16.mxu0 0
        %1010 = vmatpush2.bf16.msra.mxu0 0
        %1011 = vmatprep.mubr.bf16.mxu0 0
        %1012 = vmatmul.mubr.bf16.gmra.mxu0 %v971
        %v1013 = vpop.f32.mrf.mxu0
        %v1014 = vadd.f32 0.0, %v1013
        %v1015 = vpop.f32.mrf.mxu0
        %v1016 = vadd.f32 0.0, %v1015
        %v1017 = vpop.f32.mrf.mxu0
        %v1018 = vpop.f32.mrf.mxu0
        %1019 = vdwg.mxu0
        %v1020 = vmax.f32 %v1014, 0.0
        %v1021 = vmax.f32 %v1016, 0.0
        %v1022 = vld [vmem:[%s5] sm:$0x3]
        %v1023 = vpack.c.bf16 %v1020, %v1020
        %v1024 = vpack.c.bf16 %v1021, %v1021
        %vm1025 = vcmask 31744
        %v1027 = vsel %vm1025, %v1022, 0
        %v1030 = vsel %vm889, %v1023, 0
        %v1033 = vsel %vm889, %v1024, 0
        %1035 = vmatprep.subr.bf16.mxu0 0
        %1036 = vmatpush1.bf16.msra.mxu0 0
        %1037 = vmatprep.subr.bf16.mxu0 0
        %1038 = vmatpush1.bf16.msra.mxu0 0
        %1039 = vmatprep.subr.bf16.mxu0 0
        %1040 = vmatpush1.bf16.msra.mxu0 0
        %1041 = vmatprep.subr.bf16.mxu0 0
        %1042 = vmatpush1.bf16.msra.mxu0 0
        %1043 = vmatprep.subr.bf16.mxu0 0
        %1044 = vmatpush1.bf16.msra.mxu0 0
        %1045 = vmatprep.subr.bf16.mxu0 0
        %1046 = vmatpush1.bf16.msra.mxu0 0
        %1047 = vmatprep.subr.bf16.mxu0 0
        %1048 = vmatpush1.bf16.msra.mxu0 0
        %1049 = vmatprep.subr.bf16.mxu0 %v1033
        %1050 = vmatpush1.bf16.msra.mxu0 %v1030
        %1051 = vmatprep.subr.bf16.mxu0 0
        %1052 = vmatpush2.bf16.msra.mxu0 0
        %1053 = vmatprep.subr.bf16.mxu0 0
        %1054 = vmatpush2.bf16.msra.mxu0 0
        %1055 = vmatprep.subr.bf16.mxu0 0
        %1056 = vmatpush2.bf16.msra.mxu0 0
        %1057 = vmatprep.subr.bf16.mxu0 0
        %1058 = vmatpush2.bf16.msra.mxu0 0
        %1059 = vmatprep.subr.bf16.mxu0 0
        %1060 = vmatpush2.bf16.msra.mxu0 0
        %1061 = vmatprep.subr.bf16.mxu0 0
        %1062 = vmatpush2.bf16.msra.mxu0 0
        %1063 = vmatprep.subr.bf16.mxu0 0
        %1064 = vmatpush2.bf16.msra.mxu0 0
        %1065 = vmatprep.subr.bf16.mxu0 0
        %1066 = vmatpush2.bf16.msra.mxu0 0
        %1067 = vmatprep.mubr.bf16.mxu0 0
        %1068 = vmatmul.mubr.bf16.gmra.mxu0 %v1027
        %v1069 = vpop.f32.mrf.mxu0
        %v1070 = vadd.f32 0.0, %v1069
        %v1071 = vpop.f32.mrf.mxu0
        %v1072 = vadd.f32 0.0, %v1071
        %v1073 = vpop.f32.mrf.mxu0
        %v1074 = vpop.f32.mrf.mxu0
        %1075 = vdwg.mxu0
        %v1076 = vmax.f32 %v1070, 0.0
        %v1077 = vmax.f32 %v1072, 0.0
        %v1080 = vrot.slane %v1020, 4
        %v1081 = vrot.slane %v1021, 4
        %v1084 = vadd.f32 %v1076, %v1080
        %v1085 = vadd.f32 %v1077, %v1081
        %v1086 = vmax.f32 %v1084, 0.0
        %v1087 = vmax.f32 %v1085, 0.0
        %v1088 = vld [vmem:[%s6] sm:$0x3]
        %v1089 = vpack.c.bf16 %v1086, %v1086
        %v1090 = vpack.c.bf16 %v1087, %v1087
        %v1092 = vsel %vm1025, %v1088, 0
        %v1095 = vsel %vm889, %v1089, 0
        %v1098 = vsel %vm889, %v1090, 0
        %1100 = vmatprep.subr.bf16.mxu0 0
        %1101 = vmatpush1.bf16.msra.mxu0 0
        %1102 = vmatprep.subr.bf16.mxu0 0
        %1103 = vmatpush1.bf16.msra.mxu0 0
        %1104 = vmatprep.subr.bf16.mxu0 0
        %1105 = vmatpush1.bf16.msra.mxu0 0
        %1106 = vmatprep.subr.bf16.mxu0 0
        %1107 = vmatpush1.bf16.msra.mxu0 0
        %1108 = vmatprep.subr.bf16.mxu0 0
        %1109 = vmatpush1.bf16.msra.mxu0 0
        %1110 = vmatprep.subr.bf16.mxu0 0
        %1111 = vmatpush1.bf16.msra.mxu0 0
        %1112 = vmatprep.subr.bf16.mxu0 0
        %1113 = vmatpush1.bf16.msra.mxu0 0
        %1114 = vmatprep.subr.bf16.mxu0 %v1098
        %1115 = vmatpush1.bf16.msra.mxu0 %v1095
        %1116 = vmatprep.subr.bf16.mxu0 0
        %1117 = vmatpush2.bf16.msra.mxu0 0
        %1118 = vmatprep.subr.bf16.mxu0 0
        %1119 = vmatpush2.bf16.msra.mxu0 0
        %1120 = vmatprep.subr.bf16.mxu0 0
        %1121 = vmatpush2.bf16.msra.mxu0 0
        %1122 = vmatprep.subr.bf16.mxu0 0
        %1123 = vmatpush2.bf16.msra.mxu0 0
        %1124 = vmatprep.subr.bf16.mxu0 0
        %1125 = vmatpush2.bf16.msra.mxu0 0
        %1126 = vmatprep.subr.bf16.mxu0 0
        %1127 = vmatpush2.bf16.msra.mxu0 0
        %1128 = vmatprep.subr.bf16.mxu0 0
        %1129 = vmatpush2.bf16.msra.mxu0 0
        %1130 = vmatprep.subr.bf16.mxu0 0
        %1131 = vmatpush2.bf16.msra.mxu0 0
        %1132 = vmatprep.mubr.bf16.mxu0 0
        %1133 = vmatmul.mubr.bf16.gmra.mxu0 %v1092
        %v1134 = vpop.f32.mrf.mxu0
        %v1135 = vadd.f32 0.0, %v1134
        %v1136 = vpop.f32.mrf.mxu0
        %v1137 = vadd.f32 0.0, %v1136
        %v1138 = vpop.f32.mrf.mxu0
        %v1139 = vpop.f32.mrf.mxu0
        %1140 = vdwg.mxu0
        %v1141 = vmax.f32 %v1135, 0.0
        %v1142 = vmax.f32 %v1137, 0.0
        %v1145 = vcombine.low %v1141, %v1142
        %1147 = vst [vmem:[%s423] sm:$0xff] %v1145
        %s1148 = smul.u32 2, %s23
        %p1149 = scmp.lt.s32.totalorder %s22, 1
        %s1150 = scalar_select %p1149, %s22, 1
        %p1151 = scmp.lt.s32.totalorder %s1148, 1
        %s1152 = scalar_select %p1151, %s1148, 1
        %s1153 = smul.addr %s1150, 2
        %s1154 = sadd.s32 %s1152, %s1153
        %s1155 = smul.addr %s1154, 4
        %s1156 = scalar_lea.vmem %s7, %s1155
        // Predicated region
        $region90: #{feature_enhancement.1} parent=84 // pred_check
          %p1157 = pneg %p215
        $region91: #{feature_enhancement.1} parent=84 // pred_check_branch
          %1159 = sbr.rel (%p1157) target = $region93
        $region92: #{feature_enhancement.1} parent=84 // pred_region
          %s1160 = smul.u32 2, %s23
        $region93: #{feature_enhancement.1} parent=84 // pred_fallthru
          _
      $region85: #{feature_enhancement.1} parent=5 // pred_fallthru
        _
      %p1161 = scmp.le.s32.totalorder 2, %s13
      // Predicated region
      $region94: #{feature_enhancement.1} parent=5 // pred_check
        %p1162 = pneg %p1161
      $region95: #{feature_enhancement.1} parent=5 // pred_check_branch
        %1164 = sbr.rel (%p1162) target = $region97
      $region96: #{feature_enhancement.1} parent=5 // pred_region
        %s1165 = ssub.s32 %s13, 2
        // Predicated region
        $region98: #{feature_enhancement.1} parent=96 // pred_check
          %p1166 = pneg %p221
        $region99: #{feature_enhancement.1} parent=96 // pred_check_branch
          %1168 = sbr.rel (%p1166) target = $region101
        $region100: #{feature_enhancement.1} parent=96 // pred_region
          %s1169 = smul.u32 2, %s25
          %p1170 = scmp.lt.s32.totalorder %s24, 1
          %s1171 = scalar_select %p1170, %s24, 1
          %p1172 = scmp.lt.s32.totalorder %s1169, 1
          %s1173 = scalar_select %p1172, %s1169, 1
          %s1174 = smul.addr %s1171, 2
          %s1175 = sadd.s32 %s1173, %s1174
          %s1176 = smul.addr %s1175, 4
          %s1177 = scalar_lea.vmem %s7, %s1176
        $region101: #{feature_enhancement.1} parent=96 // pred_fallthru
          _
      $region97: #{feature_enhancement.1} parent=5 // pred_fallthru
        _
    $region6: #{feature_enhancement.1} parent=1 // loop_footer
      %s17 = sadd.s32 1, %s13
    $region7: #{feature_enhancement.1} parent=1 // loop_footer_branch
      %12 = sbr.rel target = $region3
    $region8: #{feature_enhancement.1} parent=1 // loop_exit
      _

</llo_original>
